<compile_context>
chip_gen: v7x
topology: tpu7x:2x2x1
jax: 0.10.0
libtpu: 0.0.40
codegen_flags: <defaults>
</compile_context>

<pallas_src>
import jax
import jax.numpy as jnp
from jax.experimental import pallas as pl
from jax.experimental.pallas import tpu as pltpu

INPUT_DIM = 4      # CartPole-v1 observation_space.shape[0]
HIDDEN = 64
HIDDEN_PAD = 128   # zero-padded to a full lane width
OUTPUT_DIM = 2     # CartPole-v1 action_space.n


def _round_up(x, m):
    return ((x + m - 1) // m) * m


def _cdiv(a, b):
    return -(-a // b)


def _choose_tiles(B, block_b):
    """Pick (bt, Bp, n_tiles): sublane-aligned tile, minimal padding, and
    >=2 tiles for large batches so both v7x TensorCores are used."""
    Bp8 = _round_up(max(B, 1), 8)
    n_tiles = max(1, _cdiv(Bp8, block_b))
    if n_tiles == 1 and Bp8 >= 2048:
        n_tiles = 2                      # span both TCs on v7x for big single tiles
    bt = _round_up(_cdiv(Bp8, n_tiles), 8)
    Bp = n_tiles * bt
    return bt, Bp, n_tiles


def policy_kernel(x_ref, w1_ref, b1_ref, w2d_ref, b2d_ref, out_ref):
    x = x_ref[...]                       # (bt, INPUT_DIM)   f32
    w1 = w1_ref[...]                     # (INPUT_DIM, 128)  f32

    # fc1 + bias on the VPU: K=4 unrolled broadcast multiply-adds.
    h = x[:, 0:1] * w1[0:1, :] + b1_ref[...]
    for k in range(1, INPUT_DIM):
        h = h + x[:, k:k + 1] * w1[k:k + 1, :]
    h = jnp.maximum(h, 0.0)              # (bt, 128), lane-dense

    # fc2 + 2-way softmax == sigmoid of the logit difference:
    #   softmax([l0, l1])[1] = sigmoid(l1 - l0)
    # d = h @ (w2[:,1]-w2[:,0]) + (b2[1]-b2[0]):  vmul + XLU lane-reduce.
    d = jnp.sum(h * w2d_ref[...], axis=-1, keepdims=True) + b2d_ref[...]  # (bt, 1)

    # Numerically stable sigmoid: exp on EUP, approx reciprocal on EUP.
    e = jnp.exp(-jnp.abs(d))
    p_big = pl.reciprocal(1.0 + e, approx=True)      # sigmoid(|d|)
    p1 = jnp.where(d >= 0.0, p_big, 1.0 - p_big)     # P(action = 1)
    p0 = 1.0 - p1                                    # P(action = 0); p0 + p1 == 1

    col = jax.lax.broadcasted_iota(jnp.int32, out_ref.shape, 1)
    out_ref[...] = jnp.where(col == 0, p0, p1).astype(out_ref.dtype)


def policy_network(state, w1p, b1p, w2d, b2d, *, block_b=2048):
    """state: (B, INPUT_DIM) f32. Params pre-padded / pre-differenced (prep_params).
    Returns (B, OUTPUT_DIM) action probabilities."""
    B, in_dim = state.shape
    assert in_dim == INPUT_DIM

    bt, Bp, n_tiles = _choose_tiles(B, block_b)
    if Bp != B:
        state = jnp.pad(state, ((0, Bp - B), (0, 0)))

    out = pl.pallas_call(
        policy_kernel,
        out_shape=jax.ShapeDtypeStruct((Bp, OUTPUT_DIM), jnp.float32),
        grid=(n_tiles,),
        in_specs=[
            pl.BlockSpec((bt, INPUT_DIM), lambda i: (i, 0)),
            pl.BlockSpec((INPUT_DIM, HIDDEN_PAD), lambda i: (0, 0)),  # VMEM-resident
            pl.BlockSpec((1, HIDDEN_PAD), lambda i: (0, 0)),
            pl.BlockSpec((1, HIDDEN_PAD), lambda i: (0, 0)),
            pl.BlockSpec((1, 1), lambda i: (0, 0)),
        ],
        out_specs=pl.BlockSpec((bt, OUTPUT_DIM), lambda i: (i, 0)),
        compiler_params=pltpu.CompilerParams(
            dimension_semantics=("parallel",)),   # 2 TCs on v7x; no-op on v5e/v6e
    )(state, w1p, b1p, w2d, b2d)
    return out[:B]


def init_params(key):
    """Deterministic init mimicking nn.Linear default (uniform +/- 1/sqrt(fan_in)).
    Weights stored transposed relative to PyTorch: (in_features, out_features)."""
    k1, k2, k3, k4 = jax.random.split(key, 4)
    bound1 = 1.0 / jnp.sqrt(jnp.float32(INPUT_DIM))
    bound2 = 1.0 / jnp.sqrt(jnp.float32(HIDDEN))
    w1 = jax.random.uniform(k1, (INPUT_DIM, HIDDEN), jnp.float32, -bound1, bound1)
    b1 = jax.random.uniform(k2, (1, HIDDEN), jnp.float32, -bound1, bound1)
    w2 = jax.random.uniform(k3, (HIDDEN, OUTPUT_DIM), jnp.float32, -bound2, bound2)
    b2 = jax.random.uniform(k4, (1, OUTPUT_DIM), jnp.float32, -bound2, bound2)
    return w1, b1, w2, b2


def prep_params(w1, b1, w2, b2):
    """Zero-pad hidden 64 -> 128 (lane-dense) and pre-difference fc2 for the
    2-class sigmoid formulation. Mathematically exact."""
    pad = HIDDEN_PAD - HIDDEN
    w1p = jnp.pad(w1, ((0, 0), (0, pad)))
    b1p = jnp.pad(b1, ((0, 0), (0, pad)))
    w2d = jnp.pad((w2[:, 1] - w2[:, 0]).reshape(1, HIDDEN), ((0, 0), (0, pad)))
    b2d = (b2[0, 1] - b2[0, 0]).reshape(1, 1)
    return w1p, b1p, w2d, b2d


def policy_network_ref(state, w1, b1, w2, b2):
    h = jnp.maximum(state @ w1 + b1, 0.0)
    return jax.nn.softmax(h @ w2 + b2, axis=-1)


if __name__ == "__main__":
    key = jax.random.PRNGKey(0)
    kx, kp, kx2, kx3 = jax.random.split(key, 4)

    w1, b1, w2, b2 = init_params(kp)
    w1p, b1p, w2d, b2d = prep_params(w1, b1, w2, b2)

    # Small-batch case (matches the RL usage: a couple of env states).
    batch = 2
    state = jax.random.normal(kx, (batch, INPUT_DIM), jnp.float32)
    probs = jax.block_until_ready(policy_network(state, w1p, b1p, w2d, b2d))
    ref = policy_network_ref(state, w1, b1, w2, b2)
    assert probs.shape == (batch, OUTPUT_DIM)
    assert jnp.allclose(probs, ref, atol=2e-3, rtol=2e-3)
    assert jnp.allclose(jnp.sum(probs, axis=-1), 1.0, atol=1e-5)

    # Odd batch exercises minimal-padding single-tile path (304 rows, not 512).
    batch2 = 300
    state2 = jax.random.normal(kx2, (batch2, INPUT_DIM), jnp.float32)
    probs2 = jax.block_until_ready(policy_network(state2, w1p, b1p, w2d, b2d))
    ref2 = policy_network_ref(state2, w1, b1, w2, b2)
    assert probs2.shape == (batch2, OUTPUT_DIM)
    assert jnp.allclose(probs2, ref2, atol=2e-3, rtol=2e-3)
    assert jnp.allclose(jnp.sum(probs2, axis=-1), 1.0, atol=1e-5)

    # Larger batch exercises the multi-tile grid (2 tiles -> both TCs on v7x).
    batch3 = 3000
    state3 = jax.random.normal(kx3, (batch3, INPUT_DIM), jnp.float32)
    probs3 = jax.block_until_ready(policy_network(state3, w1p, b1p, w2d, b2d))
    ref3 = policy_network_ref(state3, w1, b1, w2, b2)
    assert probs3.shape == (batch3, OUTPUT_DIM)
    assert jnp.allclose(probs3, ref3, atol=2e-3, rtol=2e-3)
    assert jnp.allclose(jnp.sum(probs3, axis=-1), 1.0, atol=1e-5)

    print("KERNEL_OK")
</pallas_src>

<mosaic_0001>
module attributes {stable_mosaic.version = 11 : i64} {
  func.func @policy_kernel(%arg0: i32, %arg1: memref<8x4xf32, #tpu.memory_space<vmem>>, %arg2: memref<4x128xf32, #tpu.memory_space<vmem>>, %arg3: memref<1x128xf32, #tpu.memory_space<vmem>>, %arg4: memref<1x128xf32, #tpu.memory_space<vmem>>, %arg5: memref<1x1xf32, #tpu.memory_space<vmem>>, %arg6: memref<8x2xf32, #tpu.memory_space<vmem>>) attributes {dimension_semantics = [#tpu.dimension_semantics<parallel>], iteration_bounds = array<i64: 1>, scalar_prefetch = 0 : i64, scratch_operands = 0 : i64, tpu.core_type = #tpu.core_type<tc>, window_params = [{transform_indices = @transform_0, window_bounds = array<i64: 8, 4>}, {pipeline_mode = #tpu.pipeline_mode<synchronous>, transform_indices = @transform_1, window_bounds = array<i64: 4, 128>}, {pipeline_mode = #tpu.pipeline_mode<synchronous>, transform_indices = @transform_2, window_bounds = array<i64: 1, 128>}, {pipeline_mode = #tpu.pipeline_mode<synchronous>, transform_indices = @transform_3, window_bounds = array<i64: 1, 128>}, {pipeline_mode = #tpu.pipeline_mode<synchronous>, transform_indices = @transform_4, window_bounds = array<i64: 1, 1>}, {transform_indices = @transform_5, window_bounds = array<i64: 8, 2>}]} {
    %c0 = arith.constant 0 : index
    %c0_0 = arith.constant 0 : index
    %0 = vector.load %arg1[%c0, %c0_0] : memref<8x4xf32, #tpu.memory_space<vmem>>, vector<8x4xf32>
    %c0_1 = arith.constant 0 : index
    %c0_2 = arith.constant 0 : index
    %1 = vector.load %arg2[%c0_1, %c0_2] : memref<4x128xf32, #tpu.memory_space<vmem>>, vector<4x128xf32>
    %2 = vector.extract_strided_slice %0 {offsets = [0, 0], sizes = [8, 1], strides = [1, 1]} : vector<8x4xf32> to vector<8x1xf32>
    %3 = vector.extract_strided_slice %1 {offsets = [0, 0], sizes = [1, 128], strides = [1, 1]} : vector<4x128xf32> to vector<1x128xf32>
    %4 = vector.broadcast %2 : vector<8x1xf32> to vector<8x128xf32>
    %5 = vector.broadcast %3 : vector<1x128xf32> to vector<8x128xf32>
    %6 = arith.mulf %4, %5 : vector<8x128xf32>
    %c0_3 = arith.constant 0 : index
    %c0_4 = arith.constant 0 : index
    %7 = vector.load %arg3[%c0_3, %c0_4] : memref<1x128xf32, #tpu.memory_space<vmem>>, vector<1x128xf32>
    %8 = vector.broadcast %7 : vector<1x128xf32> to vector<8x128xf32>
    %9 = arith.addf %6, %8 : vector<8x128xf32>
    %10 = vector.extract_strided_slice %0 {offsets = [0, 1], sizes = [8, 1], strides = [1, 1]} : vector<8x4xf32> to vector<8x1xf32>
    %11 = vector.extract_strided_slice %1 {offsets = [1, 0], sizes = [1, 128], strides = [1, 1]} : vector<4x128xf32> to vector<1x128xf32>
    %12 = vector.broadcast %10 : vector<8x1xf32> to vector<8x128xf32>
    %13 = vector.broadcast %11 : vector<1x128xf32> to vector<8x128xf32>
    %14 = arith.mulf %12, %13 : vector<8x128xf32>
    %15 = arith.addf %9, %14 : vector<8x128xf32>
    %16 = vector.extract_strided_slice %0 {offsets = [0, 2], sizes = [8, 1], strides = [1, 1]} : vector<8x4xf32> to vector<8x1xf32>
    %17 = vector.extract_strided_slice %1 {offsets = [2, 0], sizes = [1, 128], strides = [1, 1]} : vector<4x128xf32> to vector<1x128xf32>
    %18 = vector.broadcast %16 : vector<8x1xf32> to vector<8x128xf32>
    %19 = vector.broadcast %17 : vector<1x128xf32> to vector<8x128xf32>
    %20 = arith.mulf %18, %19 : vector<8x128xf32>
    %21 = arith.addf %15, %20 : vector<8x128xf32>
    %22 = vector.extract_strided_slice %0 {offsets = [0, 3], sizes = [8, 1], strides = [1, 1]} : vector<8x4xf32> to vector<8x1xf32>
    %23 = vector.extract_strided_slice %1 {offsets = [3, 0], sizes = [1, 128], strides = [1, 1]} : vector<4x128xf32> to vector<1x128xf32>
    %24 = vector.broadcast %22 : vector<8x1xf32> to vector<8x128xf32>
    %25 = vector.broadcast %23 : vector<1x128xf32> to vector<8x128xf32>
    %26 = arith.mulf %24, %25 : vector<8x128xf32>
    %27 = arith.addf %21, %26 : vector<8x128xf32>
    %cst = arith.constant 0.000000e+00 : f32
    %28 = vector.broadcast %cst : f32 to vector<8x128xf32>
    %29 = arith.maximumf %27, %28 : vector<8x128xf32>
    %c0_5 = arith.constant 0 : index
    %c0_6 = arith.constant 0 : index
    %30 = vector.load %arg4[%c0_5, %c0_6] : memref<1x128xf32, #tpu.memory_space<vmem>>, vector<1x128xf32>
    %31 = vector.broadcast %30 : vector<1x128xf32> to vector<8x128xf32>
    %32 = arith.mulf %29, %31 : vector<8x128xf32>
    %cst_7 = arith.constant dense<0.000000e+00> : vector<8xf32>
    %33 = vector.multi_reduction <add>, %32, %cst_7 [1] : vector<8x128xf32> to vector<8xf32>
    %34 = vector.shape_cast %33 : vector<8xf32> to vector<8x1xf32>
    %c0_8 = arith.constant 0 : index
    %c0_9 = arith.constant 0 : index
    %35 = vector.load %arg5[%c0_8, %c0_9] : memref<1x1xf32, #tpu.memory_space<vmem>>, vector<1x1xf32>
    %36 = vector.broadcast %35 : vector<1x1xf32> to vector<8x1xf32>
    %37 = arith.addf %34, %36 : vector<8x1xf32>
    %38 = math.absf %37 : vector<8x1xf32>
    %cst_10 = arith.constant 0.000000e+00 : f32
    %39 = vector.broadcast %cst_10 : f32 to vector<8x1xf32>
    %40 = arith.subf %39, %38 : vector<8x1xf32>
    %41 = math.exp %40 : vector<8x1xf32>
    %cst_11 = arith.constant 1.000000e+00 : f32
    %42 = vector.broadcast %cst_11 : f32 to vector<8x1xf32>
    %43 = arith.addf %42, %41 : vector<8x1xf32>
    %44 = tpu.reciprocal %43 {approx = true} : vector<8x1xf32> -> vector<8x1xf32>
    %cst_12 = arith.constant 0.000000e+00 : f32
    %45 = vector.broadcast %cst_12 : f32 to vector<8x1xf32>
    %46 = arith.cmpf oge, %37, %45 : vector<8x1xf32>
    %cst_13 = arith.constant 1.000000e+00 : f32
    %47 = vector.broadcast %cst_13 : f32 to vector<8x1xf32>
    %48 = arith.subf %47, %44 : vector<8x1xf32>
    %49 = arith.select %46, %44, %48 : vector<8x1xi1>, vector<8x1xf32>
    %cst_14 = arith.constant 1.000000e+00 : f32
    %50 = vector.broadcast %cst_14 : f32 to vector<8x1xf32>
    %51 = arith.subf %50, %49 : vector<8x1xf32>
    %52 = tpu.iota {dimensions = array<i32: 1>} : vector<8x2xi32>
    %c0_i32 = arith.constant 0 : i32
    %53 = vector.broadcast %c0_i32 : i32 to vector<8x2xi32>
    %54 = arith.cmpi eq, %52, %53 : vector<8x2xi32>
    %55 = vector.shape_cast %51 : vector<8x1xf32> to vector<8x1xf32>
    %56 = vector.broadcast %55 : vector<8x1xf32> to vector<8x2xf32>
    %57 = vector.shape_cast %49 : vector<8x1xf32> to vector<8x1xf32>
    %58 = vector.broadcast %57 : vector<8x1xf32> to vector<8x2xf32>
    %59 = arith.select %54, %56, %58 : vector<8x2xi1>, vector<8x2xf32>
    %c0_15 = arith.constant 0 : index
    %c0_16 = arith.constant 0 : index
    %60 = vector.load %arg6[%c0_15, %c0_16] : memref<8x2xf32, #tpu.memory_space<vmem>>, vector<8x2xf32>
    tpu.vector_store %arg6[%c0_15, %c0_16], %59 {strides = array<i32>} : memref<8x2xf32, #tpu.memory_space<vmem>>, vector<8x2xf32>,
    return
  }
  func.func @transform_0(%arg0: i32) -> (i32, i32) {
    %c0_i32 = arith.constant 0 : i32
    %c0_i32_0 = arith.constant 0 : i32
    return %arg0, %c0_i32 : i32, i32
  }
  func.func @transform_1(%arg0: i32) -> (i32, i32) {
    %c0_i32 = arith.constant 0 : i32
    %c0_i32_0 = arith.constant 0 : i32
    %c0_i32_1 = arith.constant 0 : i32
    return %c0_i32, %c0_i32_0 : i32, i32
  }
  func.func @transform_2(%arg0: i32) -> (i32, i32) {
    %c0_i32 = arith.constant 0 : i32
    %c0_i32_0 = arith.constant 0 : i32
    %c0_i32_1 = arith.constant 0 : i32
    return %c0_i32, %c0_i32_0 : i32, i32
  }
  func.func @transform_3(%arg0: i32) -> (i32, i32) {
    %c0_i32 = arith.constant 0 : i32
    %c0_i32_0 = arith.constant 0 : i32
    %c0_i32_1 = arith.constant 0 : i32
    return %c0_i32, %c0_i32_0 : i32, i32
  }
  func.func @transform_4(%arg0: i32) -> (i32, i32) {
    %c0_i32 = arith.constant 0 : i32
    %c0_i32_0 = arith.constant 0 : i32
    %c0_i32_1 = arith.constant 0 : i32
    return %c0_i32, %c0_i32_0 : i32, i32
  }
  func.func @transform_5(%arg0: i32) -> (i32, i32) {
    %c0_i32 = arith.constant 0 : i32
    %c0_i32_0 = arith.constant 0 : i32
    return %arg0, %c0_i32 : i32, i32
  }
}

</mosaic_0001>

<llo_original>
// kernel: tpu_custom_call.1
$region0: #{tpu_custom_call.1}
  #allocation0 [shape = 'u32[]', space=smem, size = 0x4, offset = 0x4, fixed_abs, tag = 'smem constant byte address 0x4 - core index']
  #allocation1 [shape = 'u32[144,128]{1,0:T(1,128)}', space=vmem, size = 0x12000, scoped, tag = 'internal scratch']
  #allocation2 [shape = 'f32[1,1]{1,0:T(1,128)S(1)}', space=vmem, size = 0x200, scoped, tag = 'scoped memory for tpu_custom_call.1']
  %s0 = inlined_call_operand.vmem [shape: f32[8,4], index: 0, kind: input, shape index: {}]
  %s1 = inlined_call_operand.vmem [shape: f32[4,128], index: 1, kind: input, shape index: {}]
  %s2 = inlined_call_operand.vmem [shape: f32[1,128], index: 2, kind: input, shape index: {}]
  %s3 = inlined_call_operand.vmem [shape: f32[1,128], index: 3, kind: input, shape index: {}]
  %s4 = inlined_call_operand.<no memory space> [shape: f32[1,1], index: 4, kind: input, shape index: {}]
  %s5 = inlined_call_operand.vmem [shape: f32[8,2], index: 5, kind: output, shape index: {}]
  %s6 = sld [smem:[#allocation0]]
  $region30: #{tpu_custom_call.1} parent=0
    _
  %s8 = ssub.s32 1, %s6
  %s9 = scalar_select 0, %s8, %s6
  %v10 = vstv %s4
  %11 = vst [vmem:[#allocation2] sm:$0x1] %v10
  // Predicated region
  $region2: #{tpu_custom_call.1} parent=0 // pred_check
    _
  $region3: #{tpu_custom_call.1} parent=0 // pred_check_branch
    %13 = sbr.rel (0) target = $region5
  $region4: #{tpu_custom_call.1} parent=0 // pred_region
    _
  $region5: #{tpu_custom_call.1} parent=0 // pred_fallthru
    _
  // Predicated region
  $region6: #{tpu_custom_call.1} parent=0 // pred_check
    _
  $region7: #{tpu_custom_call.1} parent=0 // pred_check_branch
    %15 = sbr.rel (0) target = $region9
  $region8: #{tpu_custom_call.1} parent=0 // pred_region
    _
  $region9: #{tpu_custom_call.1} parent=0 // pred_fallthru
    _
  // Predicated region
  $region10: #{tpu_custom_call.1} parent=0 // pred_check
    _
  $region11: #{tpu_custom_call.1} parent=0 // pred_check_branch
    %17 = sbr.rel (0) target = $region13
  $region12: #{tpu_custom_call.1} parent=0 // pred_region
    _
  $region13: #{tpu_custom_call.1} parent=0 // pred_fallthru
    _
  // Predicated region
  $region14: #{tpu_custom_call.1} parent=0 // pred_check
    _
  $region15: #{tpu_custom_call.1} parent=0 // pred_check_branch
    %19 = sbr.rel (0) target = $region17
  $region16: #{tpu_custom_call.1} parent=0 // pred_region
    _
  $region17: #{tpu_custom_call.1} parent=0 // pred_fallthru
    _
  // Predicated region
  $region18: #{tpu_custom_call.1} parent=0 // pred_check
    _
  $region19: #{tpu_custom_call.1} parent=0 // pred_check_branch
    %21 = sbr.rel (0) target = $region21
  $region20: #{tpu_custom_call.1} parent=0 // pred_region
    _
  $region21: #{tpu_custom_call.1} parent=0 // pred_fallthru
    _
  %v22 = vld [vmem:[%s0] sm:$0xff]
  %v23 = vld [vmem:[%s1] sm:$0xf]
  %25 = vset.pattern.permute.xlu0 0
  %26 = vperm.xlu0 %25, %v22
  %v27 = vpop.permute.xlu0 %26
  %v29 = vlaneseq
  %v30 = vshrl.u32 %v29, 7
  %v31 = vsub.s32 0, %v30
  %v32 = vrot.slane %v23, %v31
  %v33 = vmul.f32 %v27, %v32
  %v34 = vld [vmem:[%s2] sm:$0x1]
  %v36 = vlaneseq
  %v37 = vshrl.u32 %v36, 7
  %v38 = vsub.s32 0, %v37
  %v39 = vrot.slane %v34, %v38
  %v41 = vadd.f32 %v33, %v39
  %42 = vset.pattern.permute.xlu0 1
  %43 = vperm.xlu0 %42, %v22
  %v44 = vpop.permute.xlu0 %43
  %v46 = vlaneseq
  %v47 = vshrl.u32 %v46, 7
  %v48 = vsub.s32 1, %v47
  %v49 = vrot.slane %v23, %v48
  %v50 = vmul.f32 %v44, %v49
  %v51 = vadd.f32 %v41, %v50
  %52 = vset.pattern.permute.xlu0 2
  %53 = vperm.xlu0 %52, %v22
  %v54 = vpop.permute.xlu0 %53
  %v56 = vlaneseq
  %v57 = vshrl.u32 %v56, 7
  %v58 = vsub.s32 2, %v57
  %v59 = vrot.slane %v23, %v58
  %v60 = vmul.f32 %v54, %v59
  %v61 = vadd.f32 %v51, %v60
  %62 = vset.pattern.permute.xlu0 3
  %63 = vperm.xlu0 %62, %v22
  %v64 = vpop.permute.xlu0 %63
  %v66 = vlaneseq
  %v67 = vshrl.u32 %v66, 7
  %v68 = vsub.s32 3, %v67
  %v69 = vrot.slane %v23, %v68
  %v70 = vmul.f32 %v64, %v69
  %v71 = vadd.f32 %v61, %v70
  %v72 = vmax.f32 %v71, 0.0
  %v73 = vld [vmem:[%s3] sm:$0x1]
  %v75 = vlaneseq
  %v76 = vshrl.u32 %v75, 7
  %v77 = vsub.s32 0, %v76
  %v78 = vrot.slane %v73, %v77
  %v80 = vmul.f32 %v72, %v78
  %81 = vadd.xlane.f32.xlu0 %v80
  %v82 = vpop.xlane.xlu0 %81
  %v83 = vld [vmem:[#allocation2] sm:$0x1]
  %v85 = vlaneseq
  %v86 = vshrl.u32 %v85, 7
  %v87 = vsub.s32 0, %v86
  %v88 = vrot.slane %v83, %v87
  %v90 = vadd.f32 %v82, %v88
  %v91 = vand.u32 2147483647, %v90
  %v92 = vsub.f32 0.0, %v91
  %v93 = vmul.f32 %v92, 1.442695
  %v94 = vpow.pop %v93
  %v95 = vadd.f32 %v94, 1.0
  %v96 = vrcp.pop %v95
  %vm97 = vcmp.ge.f32.partialorder %v90, 0.0
  %v98 = vsub.f32 1.0, %v96
  %v99 = vsel %vm97, %v96, %v98
  %v100 = vsub.f32 1.0, %v99
  %v101 = vlaneseq
  %v102 = vand.u32 %v101, 127
  %vm103 = vcmp.eq.s32.totalorder %v102, 0
  %105 = vset.pattern.permute.xlu0 0
  %106 = vperm.xlu0 %105, %v100
  %v107 = vpop.permute.xlu0 %106
  %110 = vset.pattern.permute.xlu0 0
  %111 = vperm.xlu0 %110, %v99
  %v112 = vpop.permute.xlu0 %111
  %v114 = vsel %vm103, %v107, %v112
  %vm115 = vcmask 15360
  %116 = vst.msk [vmem:[%s5] sm:$0xff] %vm115, %v114
  // Predicated region
  $region22: #{tpu_custom_call.1} parent=0 // pred_check
    _
  $region23: #{tpu_custom_call.1} parent=0 // pred_check_branch
    %118 = sbr.rel (0) target = $region25
  $region24: #{tpu_custom_call.1} parent=0 // pred_region
    _
  $region25: #{tpu_custom_call.1} parent=0 // pred_fallthru
    _
  // Predicated region
  $region26: #{tpu_custom_call.1} parent=0 // pred_check
    _
  $region27: #{tpu_custom_call.1} parent=0 // pred_check_branch
    %120 = sbr.rel (0) target = $region29
  $region28: #{tpu_custom_call.1} parent=0 // pred_region
    _
  $region29: #{tpu_custom_call.1} parent=0 // pred_fallthru
    _

</llo_original>
